<compile_context>
chip_gen: v7x
topology: tpu7x:2x2x1
jax: 0.10.0
libtpu: 0.0.40
codegen_flags: <defaults>
</compile_context>

<pallas_src>
import functools
import math

import jax
import jax.numpy as jnp
from jax.experimental import pallas as pl
from jax.experimental.pallas import tpu as pltpu

_LANE = 128
_MAX_TF = 8192                       # max lane-tile width
_BLOCK_BYTES_CAP = 2 * 1024 * 1024   # per-input per-block f32 bytes
_VMEM_LIMIT = 48 * 1024 * 1024       # fits v7x (64 MiB) and v5e/v6e (128 MiB)


def _bce_dice_sums_kernel(x_ref, t_ref, sx_ref, st_ref, sxt_ref, sbce_ref, *, nc):
    """Accumulate lane-partial sums over feature tiles.

    Outputs (all (row_tile, 128), f32) hold per-lane partial sums of:
      sx   = x
      st   = t
      sxt  = x * t
      sbce = -( t*log(x) + (1-t)*log(1-x) )   (logs clamped at -100, as torch BCELoss)
    Cross-lane + per-sample reductions are done by the (tiny) JAX glue.
    """
    k = pl.program_id(1)  # trailing reduction axis

    @pl.when(k == 0)
    def _():
        sx_ref[...] = jnp.zeros_like(sx_ref)
        st_ref[...] = jnp.zeros_like(st_ref)
        sxt_ref[...] = jnp.zeros_like(sxt_ref)
        sbce_ref[...] = jnp.zeros_like(sbce_ref)

    x = x_ref[...].astype(jnp.float32)
    t = t_ref[...].astype(jnp.float32)

    log_x = jnp.maximum(jnp.log(x), -100.0)
    log_1mx = jnp.maximum(jnp.log1p(-x), -100.0)
    bce = -(t * log_x + (1.0 - t) * log_1mx)

    def fold(v):
        # (rows, nc*128) -> (rows, 128): pure VPU adds over static lane-aligned
        # slices; no XLU cross-lane reduction inside the grid loop.
        acc = v[:, 0:_LANE]
        for c in range(1, nc):
            acc = acc + v[:, c * _LANE:(c + 1) * _LANE]
        return acc

    sx_ref[...] += fold(x)
    st_ref[...] += fold(t)
    sxt_ref[...] += fold(x * t)
    sbce_ref[...] += fold(bce)


def _round_up(a, b):
    return -(-a // b) * b


def _plan(n, f):
    """Pick (chunks/sample r, rows, row_tile, lane tile tf, padded row len)."""
    # r chunks per sample so n*r is a multiple of 8 (fill sublanes); grow
    # toward ~256 rows as long as each chunk stays reasonably long.
    r = 8 // math.gcd(n, 8)
    while n * r * 2 <= 256 and -(-f // (r * 2)) >= 1024:
        r *= 2
    rows = n * r
    # Split rows into 2 blocks when possible -> 'parallel' axis for megacore.
    row_tile = rows // 2 if (rows >= 16 and rows % 16 == 0) else rows
    l_raw = -(-f // r)
    # Lane tile: biggest multiple of 128 under the per-block VMEM budget.
    tf = (_BLOCK_BYTES_CAP // (row_tile * 4)) // _LANE * _LANE
    tf = max(_LANE, min(tf, _MAX_TF, _round_up(l_raw, _LANE)))
    l_pad = _round_up(l_raw, tf)
    return r, rows, row_tile, tf, l_pad


def bce_dice_loss(input_nchw, target_nchw):
    """JAX/Pallas equivalent of BCEDiceLoss.forward (scalar f32 output)."""
    n = input_nchw.shape[0]
    x = input_nchw.reshape(n, -1)
    t = target_nchw.reshape(n, -1)
    f = x.shape[1]

    r, rows, row_tile, tf, l_pad = _plan(n, f)
    f_pad = r * l_pad
    if f_pad != f:
        # x=0, t=0 padding contributes exactly 0 to sx, st, sxt and sbce
        # (clamped logs make t*log(x) = 0 and (1-t)*log1p(-x) = 0).
        pad = ((0, 0), (0, f_pad - f))
        x = jnp.pad(x, pad)
        t = jnp.pad(t, pad)
    xr = x.reshape(rows, l_pad)
    tr = t.reshape(rows, l_pad)

    grid = (rows // row_tile, l_pad // tf)
    kernel = functools.partial(_bce_dice_sums_kernel, nc=tf // _LANE)

    out_shape = [jax.ShapeDtypeStruct((rows, _LANE), jnp.float32)] * 4
    in_spec = pl.BlockSpec((row_tile, tf), lambda i, k: (i, k))
    out_spec = pl.BlockSpec((row_tile, _LANE), lambda i, k: (i, 0))

    sxp, stp, sxtp, sbcep = pl.pallas_call(
        kernel,
        out_shape=out_shape,
        grid_spec=pltpu.PrefetchScalarGridSpec(
            num_scalar_prefetch=0,
            grid=grid,
            in_specs=[in_spec, in_spec],
            out_specs=[out_spec, out_spec, out_spec, out_spec],
        ),
        compiler_params=pltpu.CompilerParams(
            dimension_semantics=("parallel", "arbitrary"),
            vmem_limit_bytes=_VMEM_LIMIT,
        ),
    )(xr, tr)

    # Final reductions on tiny (rows, 128) arrays + scalar combination (glue).
    sx = sxp.sum(axis=1).reshape(n, r).sum(axis=1)
    st = stp.sum(axis=1).reshape(n, r).sum(axis=1)
    sxt = sxtp.sum(axis=1).reshape(n, r).sum(axis=1)

    smooth = 1e-05
    bce = jnp.sum(sbcep) / jnp.float32(n * f)
    dice_per_sample = (2.0 * sxt + smooth) / (sx + st + smooth)
    dice = 1.0 - jnp.sum(dice_per_sample) / jnp.float32(n)
    return bce + dice


def _reference(input_nchw, target_nchw):
    """Pure-jnp reference mirroring the PyTorch forward."""
    n = input_nchw.shape[0]
    x = input_nchw.reshape(n, -1).astype(jnp.float32)
    t = target_nchw.reshape(n, -1).astype(jnp.float32)
    bce = jnp.mean(-(t * jnp.log(x) + (1.0 - t) * jnp.log1p(-x)))
    smooth = 1e-05
    inter = (x * t).sum(1)
    dice = (2.0 * inter + smooth) / (x.sum(1) + t.sum(1) + smooth)
    dice = 1.0 - dice.sum() / n
    return bce + dice


if __name__ == "__main__":
    key = jax.random.PRNGKey(0)
    k1, k2 = jax.random.split(key)

    N, C, H, W = 2, 4, 16, 16  # small NCHW shapes
    # Predictions are probabilities in (0, 1) (post-sigmoid), targets binary.
    logits = jax.random.normal(k1, (N, C, H, W), dtype=jnp.float32)
    pred = jax.nn.sigmoid(logits)
    target = (jax.random.uniform(k2, (N, C, H, W)) > 0.5).astype(jnp.float32)

    loss = jax.block_until_ready(bce_dice_loss(pred, target))
    ref = jax.block_until_ready(_reference(pred, target))

    assert jnp.allclose(loss, ref, rtol=1e-5, atol=1e-5), (loss, ref)
    print("KERNEL_OK")
</pallas_src>

<mosaic_0001>
module attributes {stable_mosaic.version = 11 : i64} {
  func.func @_bce_dice_sums_kernel(%arg0: i32, %arg1: i32, %arg2: memref<8x256xf32, #tpu.memory_space<vmem>>, %arg3: memref<8x256xf32, #tpu.memory_space<vmem>>, %arg4: memref<8x128xf32, #tpu.memory_space<vmem>>, %arg5: memref<8x128xf32, #tpu.memory_space<vmem>>, %arg6: memref<8x128xf32, #tpu.memory_space<vmem>>, %arg7: memref<8x128xf32, #tpu.memory_space<vmem>>) attributes {dimension_semantics = [#tpu.dimension_semantics<parallel>, #tpu.dimension_semantics<arbitrary>], iteration_bounds = array<i64: 1, 1>, scalar_prefetch = 0 : i64, scratch_operands = 0 : i64, tpu.core_type = #tpu.core_type<tc>, window_params = [{transform_indices = @transform_0, window_bounds = array<i64: 8, 256>}, {transform_indices = @transform_1, window_bounds = array<i64: 8, 256>}, {transform_indices = @transform_2, window_bounds = array<i64: 8, 128>}, {transform_indices = @transform_3, window_bounds = array<i64: 8, 128>}, {transform_indices = @transform_4, window_bounds = array<i64: 8, 128>}, {transform_indices = @transform_5, window_bounds = array<i64: 8, 128>}]} {
    %c0_i32 = arith.constant 0 : i32
    %0 = arith.cmpi eq, %arg1, %c0_i32 : i32
    %1 = arith.extui %0 : i1 to i32
    %c0_i32_0 = arith.constant 0 : i32
    %2 = arith.cmpi ne, %1, %c0_i32_0 : i32
    scf.if %2 {
      %cst_24 = arith.constant 0.000000e+00 : f32
      %45 = vector.broadcast %cst_24 : f32 to vector<8x128xf32>
      %c0_25 = arith.constant 0 : index
      %c0_26 = arith.constant 0 : index
      %46 = vector.load %arg4[%c0_25, %c0_26] : memref<8x128xf32, #tpu.memory_space<vmem>>, vector<8x128xf32>
      tpu.vector_store %arg4[%c0_25, %c0_26], %45 {strides = array<i32>} : memref<8x128xf32, #tpu.memory_space<vmem>>, vector<8x128xf32>,
      %cst_27 = arith.constant 0.000000e+00 : f32
      %47 = vector.broadcast %cst_27 : f32 to vector<8x128xf32>
      %c0_28 = arith.constant 0 : index
      %c0_29 = arith.constant 0 : index
      %48 = vector.load %arg5[%c0_28, %c0_29] : memref<8x128xf32, #tpu.memory_space<vmem>>, vector<8x128xf32>
      tpu.vector_store %arg5[%c0_28, %c0_29], %47 {strides = array<i32>} : memref<8x128xf32, #tpu.memory_space<vmem>>, vector<8x128xf32>,
      %cst_30 = arith.constant 0.000000e+00 : f32
      %49 = vector.broadcast %cst_30 : f32 to vector<8x128xf32>
      %c0_31 = arith.constant 0 : index
      %c0_32 = arith.constant 0 : index
      %50 = vector.load %arg6[%c0_31, %c0_32] : memref<8x128xf32, #tpu.memory_space<vmem>>, vector<8x128xf32>
      tpu.vector_store %arg6[%c0_31, %c0_32], %49 {strides = array<i32>} : memref<8x128xf32, #tpu.memory_space<vmem>>, vector<8x128xf32>,
      %cst_33 = arith.constant 0.000000e+00 : f32
      %51 = vector.broadcast %cst_33 : f32 to vector<8x128xf32>
      %c0_34 = arith.constant 0 : index
      %c0_35 = arith.constant 0 : index
      %52 = vector.load %arg7[%c0_34, %c0_35] : memref<8x128xf32, #tpu.memory_space<vmem>>, vector<8x128xf32>
      tpu.vector_store %arg7[%c0_34, %c0_35], %51 {strides = array<i32>} : memref<8x128xf32, #tpu.memory_space<vmem>>, vector<8x128xf32>,
    } else {
    }
    %c0 = arith.constant 0 : index
    %c0_1 = arith.constant 0 : index
    %3 = vector.load %arg2[%c0, %c0_1] : memref<8x256xf32, #tpu.memory_space<vmem>>, vector<8x256xf32>
    %c0_2 = arith.constant 0 : index
    %c0_3 = arith.constant 0 : index
    %4 = vector.load %arg3[%c0_2, %c0_3] : memref<8x256xf32, #tpu.memory_space<vmem>>, vector<8x256xf32>
    %5 = math.log %3 : vector<8x256xf32>
    %cst = arith.constant -1.000000e+02 : f32
    %6 = vector.broadcast %cst : f32 to vector<8x256xf32>
    %7 = arith.maximumf %5, %6 : vector<8x256xf32>
    %cst_4 = arith.constant 0.000000e+00 : f32
    %8 = vector.broadcast %cst_4 : f32 to vector<8x256xf32>
    %9 = arith.subf %8, %3 : vector<8x256xf32>
    %10 = math.log1p %9 : vector<8x256xf32>
    %cst_5 = arith.constant -1.000000e+02 : f32
    %11 = vector.broadcast %cst_5 : f32 to vector<8x256xf32>
    %12 = arith.maximumf %10, %11 : vector<8x256xf32>
    %13 = arith.mulf %4, %7 : vector<8x256xf32>
    %cst_6 = arith.constant 1.000000e+00 : f32
    %14 = vector.broadcast %cst_6 : f32 to vector<8x256xf32>
    %15 = arith.subf %14, %4 : vector<8x256xf32>
    %16 = arith.mulf %15, %12 : vector<8x256xf32>
    %17 = arith.addf %13, %16 : vector<8x256xf32>
    %cst_7 = arith.constant 0.000000e+00 : f32
    %18 = vector.broadcast %cst_7 : f32 to vector<8x256xf32>
    %19 = arith.subf %18, %17 : vector<8x256xf32>
    %c0_8 = arith.constant 0 : index
    %c0_9 = arith.constant 0 : index
    %20 = vector.load %arg4[%c0_8, %c0_9] : memref<8x128xf32, #tpu.memory_space<vmem>>, vector<8x128xf32>
    %21 = vector.extract_strided_slice %3 {offsets = [0, 0], sizes = [8, 128], strides = [1, 1]} : vector<8x256xf32> to vector<8x128xf32>
    %22 = vector.extract_strided_slice %3 {offsets = [0, 128], sizes = [8, 128], strides = [1, 1]} : vector<8x256xf32> to vector<8x128xf32>
    %23 = arith.addf %21, %22 : vector<8x128xf32>
    %24 = arith.addf %20, %23 : vector<8x128xf32>
    %c0_10 = arith.constant 0 : index
    %c0_11 = arith.constant 0 : index
    %25 = vector.load %arg4[%c0_10, %c0_11] : memref<8x128xf32, #tpu.memory_space<vmem>>, vector<8x128xf32>
    tpu.vector_store %arg4[%c0_10, %c0_11], %24 {strides = array<i32>} : memref<8x128xf32, #tpu.memory_space<vmem>>, vector<8x128xf32>,
    %c0_12 = arith.constant 0 : index
    %c0_13 = arith.constant 0 : index
    %26 = vector.load %arg5[%c0_12, %c0_13] : memref<8x128xf32, #tpu.memory_space<vmem>>, vector<8x128xf32>
    %27 = vector.extract_strided_slice %4 {offsets = [0, 0], sizes = [8, 128], strides = [1, 1]} : vector<8x256xf32> to vector<8x128xf32>
    %28 = vector.extract_strided_slice %4 {offsets = [0, 128], sizes = [8, 128], strides = [1, 1]} : vector<8x256xf32> to vector<8x128xf32>
    %29 = arith.addf %27, %28 : vector<8x128xf32>
    %30 = arith.addf %26, %29 : vector<8x128xf32>
    %c0_14 = arith.constant 0 : index
    %c0_15 = arith.constant 0 : index
    %31 = vector.load %arg5[%c0_14, %c0_15] : memref<8x128xf32, #tpu.memory_space<vmem>>, vector<8x128xf32>
    tpu.vector_store %arg5[%c0_14, %c0_15], %30 {strides = array<i32>} : memref<8x128xf32, #tpu.memory_space<vmem>>, vector<8x128xf32>,
    %c0_16 = arith.constant 0 : index
    %c0_17 = arith.constant 0 : index
    %32 = vector.load %arg6[%c0_16, %c0_17] : memref<8x128xf32, #tpu.memory_space<vmem>>, vector<8x128xf32>
    %33 = arith.mulf %3, %4 : vector<8x256xf32>
    %34 = vector.extract_strided_slice %33 {offsets = [0, 0], sizes = [8, 128], strides = [1, 1]} : vector<8x256xf32> to vector<8x128xf32>
    %35 = vector.extract_strided_slice %33 {offsets = [0, 128], sizes = [8, 128], strides = [1, 1]} : vector<8x256xf32> to vector<8x128xf32>
    %36 = arith.addf %34, %35 : vector<8x128xf32>
    %37 = arith.addf %32, %36 : vector<8x128xf32>
    %c0_18 = arith.constant 0 : index
    %c0_19 = arith.constant 0 : index
    %38 = vector.load %arg6[%c0_18, %c0_19] : memref<8x128xf32, #tpu.memory_space<vmem>>, vector<8x128xf32>
    tpu.vector_store %arg6[%c0_18, %c0_19], %37 {strides = array<i32>} : memref<8x128xf32, #tpu.memory_space<vmem>>, vector<8x128xf32>,
    %c0_20 = arith.constant 0 : index
    %c0_21 = arith.constant 0 : index
    %39 = vector.load %arg7[%c0_20, %c0_21] : memref<8x128xf32, #tpu.memory_space<vmem>>, vector<8x128xf32>
    %40 = vector.extract_strided_slice %19 {offsets = [0, 0], sizes = [8, 128], strides = [1, 1]} : vector<8x256xf32> to vector<8x128xf32>
    %41 = vector.extract_strided_slice %19 {offsets = [0, 128], sizes = [8, 128], strides = [1, 1]} : vector<8x256xf32> to vector<8x128xf32>
    %42 = arith.addf %40, %41 : vector<8x128xf32>
    %43 = arith.addf %39, %42 : vector<8x128xf32>
    %c0_22 = arith.constant 0 : index
    %c0_23 = arith.constant 0 : index
    %44 = vector.load %arg7[%c0_22, %c0_23] : memref<8x128xf32, #tpu.memory_space<vmem>>, vector<8x128xf32>
    tpu.vector_store %arg7[%c0_22, %c0_23], %43 {strides = array<i32>} : memref<8x128xf32, #tpu.memory_space<vmem>>, vector<8x128xf32>,
    return
  }
  func.func @transform_0(%arg0: i32, %arg1: i32) -> (i32, i32) {
    %c0_i32 = arith.constant 0 : i32
    return %arg0, %arg1 : i32, i32
  }
  func.func @transform_1(%arg0: i32, %arg1: i32) -> (i32, i32) {
    %c0_i32 = arith.constant 0 : i32
    return %arg0, %arg1 : i32, i32
  }
  func.func @transform_2(%arg0: i32, %arg1: i32) -> (i32, i32) {
    %c0_i32 = arith.constant 0 : i32
    %c0_i32_0 = arith.constant 0 : i32
    return %arg0, %c0_i32 : i32, i32
  }
  func.func @transform_3(%arg0: i32, %arg1: i32) -> (i32, i32) {
    %c0_i32 = arith.constant 0 : i32
    %c0_i32_0 = arith.constant 0 : i32
    return %arg0, %c0_i32 : i32, i32
  }
  func.func @transform_4(%arg0: i32, %arg1: i32) -> (i32, i32) {
    %c0_i32 = arith.constant 0 : i32
    %c0_i32_0 = arith.constant 0 : i32
    return %arg0, %c0_i32 : i32, i32
  }
  func.func @transform_5(%arg0: i32, %arg1: i32) -> (i32, i32) {
    %c0_i32 = arith.constant 0 : i32
    %c0_i32_0 = arith.constant 0 : i32
    return %arg0, %c0_i32 : i32, i32
  }
}

</mosaic_0001>

<llo_original>
// kernel: tpu_custom_call.1
$region0: #{tpu_custom_call.1}
  #allocation0 [shape = 'u32[]', space=smem, size = 0x4, offset = 0x4, fixed_abs, tag = 'smem constant byte address 0x4 - core index']
  #allocation1 [shape = 'u32[144,128]{1,0:T(1,128)}', space=vmem, size = 0x12000, scoped, tag = 'internal scratch']
  %s0 = inlined_call_operand.hbm [shape: f32[8,256], index: 0, kind: input, shape index: {}]
  %s1 = inlined_call_operand.hbm [shape: f32[8,256], index: 1, kind: input, shape index: {}]
  %s2 = inlined_call_operand.hbm [shape: f32[8,128], index: 2, kind: output, shape index: {0}]
  %s3 = inlined_call_operand.hbm [shape: f32[8,128], index: 3, kind: output, shape index: {1}]
  %s4 = inlined_call_operand.hbm [shape: f32[8,128], index: 4, kind: output, shape index: {2}]
  %s5 = inlined_call_operand.hbm [shape: f32[8,128], index: 5, kind: output, shape index: {3}]
  %6 = xla_tuple %s2, %s3, %s4, %s5
  %s7 = sld [smem:[#allocation0]]
  $region54: #{tpu_custom_call.1} parent=0
    _
  %s9 = ssub.s32 1, %s7
  %s10 = scalar_select 0, %s9, %s7
  $region1: #{tpu_custom_call.1} parent=0
    #allocation2 [shape = 'u8[8192]{0}', space=vmem, size = 0x2000, scoped, tag = 'input window, operand 0, single buffered']
    #allocation3 [shape = 's32[1]{0}', space=sflag, size = 0x4, scoped, tag = 'scoped memory for tpu_custom_call.1']
    #allocation4 [shape = 's32[1]{0}', space=sflag, size = 0x4, scoped, tag = 'scoped memory for tpu_custom_call.1']
    #allocation5 [shape = 'u8[8192]{0}', space=vmem, size = 0x2000, scoped, tag = 'input window, operand 1, single buffered']
    #allocation6 [shape = 's32[1]{0}', space=sflag, size = 0x4, scoped, tag = 'scoped memory for tpu_custom_call.1']
    #allocation7 [shape = 'u8[4096]{0}', space=vmem, size = 0x1000, scoped, tag = 'output window, operand 0, single buffered']
    #allocation8 [shape = 'u8[4096]{0}', space=vmem, size = 0x1000, scoped, tag = 'output window, operand 1, single buffered']
    #allocation9 [shape = 's32[1]{0}', space=sflag, size = 0x4, scoped, tag = 'scoped memory for tpu_custom_call.1']
    #allocation10 [shape = 'u8[4096]{0}', space=vmem, size = 0x1000, scoped, tag = 'output window, operand 2, single buffered']
    #allocation11 [shape = 'u8[4096]{0}', space=vmem, size = 0x1000, scoped, tag = 'output window, operand 3, single buffered']
    #allocation12 [shape = 's32[1]{0}', space=sflag, size = 0x4, scoped, tag = 'scoped memory for tpu_custom_call.1']
    %11 = vsyncpa [#allocation3], 0
    %12 = vsyncpa [#allocation6], 0
    %13 = vsyncpa [#allocation4], 0
    %14 = vsyncpa [#allocation9], 0
    %15 = vsyncpa [#allocation12], 0
    // Predicated region
    $region2: #{tpu_custom_call.1} parent=1 // pred_check
      _
    $region3: #{tpu_custom_call.1} parent=1 // pred_check_branch
      %17 = sbr.rel (0) target = $region5
    $region4: #{tpu_custom_call.1} parent=1 // pred_region
      %s19 = ssub.s32 256, 256
      %20 = vsyncadd [#allocation3], %s19
      %s22 = sshll.u32 [#allocation2], 4
      %s23 = int_to_ptr.vmem [resolvable:$true] %s22
      %25 = dma.hbm_to_vmem [thread:$0]  %s0, 256, %s23, [#allocation3]
    $region5: #{tpu_custom_call.1} parent=1 // pred_fallthru
      _
    // Predicated region
    $region6: #{tpu_custom_call.1} parent=1 // pred_check
      _
    $region7: #{tpu_custom_call.1} parent=1 // pred_check_branch
      %27 = sbr.rel (0) target = $region9
    $region8: #{tpu_custom_call.1} parent=1 // pred_region
      %s29 = ssub.s32 256, 256
      %30 = vsyncadd [#allocation6], %s29
      %s32 = sshll.u32 [#allocation5], 4
      %s33 = int_to_ptr.vmem [resolvable:$true] %s32
      %35 = dma.hbm_to_vmem [thread:$0]  %s1, 256, %s33, [#allocation6]
    $region9: #{tpu_custom_call.1} parent=1 // pred_fallthru
      _
    // Predicated region
    $region10: #{tpu_custom_call.1} parent=1 // pred_check
      _
    $region11: #{tpu_custom_call.1} parent=1 // pred_check_branch
      %37 = sbr.rel (0) target = $region13
    $region12: #{tpu_custom_call.1} parent=1 // pred_region
      %38 = dma.done [#allocation3], 256
    $region13: #{tpu_custom_call.1} parent=1 // pred_fallthru
      _
    // Predicated region
    $region14: #{tpu_custom_call.1} parent=1 // pred_check
      _
    $region15: #{tpu_custom_call.1} parent=1 // pred_check_branch
      %40 = sbr.rel (0) target = $region17
    $region16: #{tpu_custom_call.1} parent=1 // pred_region
      %41 = dma.done [#allocation6], 256
    $region17: #{tpu_custom_call.1} parent=1 // pred_fallthru
      _
    %p42 = scmp.eq.s32.totalorder 0, 0
    // Predicated region
    $region18: #{tpu_custom_call.1} parent=1 // pred_check
      %p43 = pneg %p42
    $region19: #{tpu_custom_call.1} parent=1 // pred_check_branch
      %45 = sbr.rel (%p43) target = $region21
    $region20: #{tpu_custom_call.1} parent=1 // pred_region
      %46 = vst [vmem:[#allocation7] sm:$0xff] 0.0
      %47 = vst [vmem:[#allocation8] sm:$0xff] 0.0
      %48 = vst [vmem:[#allocation10] sm:$0xff] 0.0
      %49 = vst [vmem:[#allocation11] sm:$0xff] 0.0
    $region21: #{tpu_custom_call.1} parent=1 // pred_fallthru
      _
    %v50 = vld [vmem:[#allocation2] sm:$0xff]
    %v51 = vld [vmem:[#allocation2 + $0x8] sm:$0xff]
    %v52 = vld [vmem:[#allocation5] sm:$0xff]
    %v53 = vld [vmem:[#allocation5 + $0x8] sm:$0xff]
    %v54 = vlog2.pop %v50
    %v55 = vmul.f32 %v54, 0.6931472
    %v56 = vlog2.pop %v51
    %v57 = vmul.f32 %v56, 0.6931472
    %v58 = vmax.f32 %v55, -100.0
    %v59 = vmax.f32 %v57, -100.0
    %v60 = vsub.f32 0.0, %v50
    %v61 = vsub.f32 0.0, %v51
    %v62 = vadd.f32 %v60, 1.0
    %v63 = vlog2.pop %v62
    %v64 = vmul.f32 %v63, 0.6931472
    %v65 = vmul.f32 -0.5, %v60
    %v66 = vadd.f32 %v65, 1.0
    %v67 = vmul.f32 %v66, %v60
    %v68 = vand.u32 2147483647, %v60
    %vm69 = vcmp.lt.f32.partialorder %v68, 0.0004427343
    %v70 = vsel %vm69, %v67, %v64
    %v71 = vadd.f32 %v61, 1.0
    %v72 = vlog2.pop %v71
    %v73 = vmul.f32 %v72, 0.6931472
    %v74 = vmul.f32 -0.5, %v61
    %v75 = vadd.f32 %v74, 1.0
    %v76 = vmul.f32 %v75, %v61
    %v77 = vand.u32 2147483647, %v61
    %vm78 = vcmp.lt.f32.partialorder %v77, 0.0004427343
    %v79 = vsel %vm78, %v76, %v73
    %v80 = vmax.f32 %v70, -100.0
    %v81 = vmax.f32 %v79, -100.0
    %v82 = vmul.f32 %v52, %v58
    %v83 = vmul.f32 %v53, %v59
    %v84 = vsub.f32 1.0, %v52
    %v85 = vsub.f32 1.0, %v53
    %v86 = vmul.f32 %v84, %v80
    %v87 = vmul.f32 %v85, %v81
    %v88 = vadd.f32 %v82, %v86
    %v89 = vadd.f32 %v83, %v87
    %v90 = vsub.f32 0.0, %v88
    %v91 = vsub.f32 0.0, %v89
    %v92 = vld [vmem:[#allocation7] sm:$0xff]
    %v93 = vadd.f32 %v50, %v51
    %v94 = vadd.f32 %v92, %v93
    %95 = vst [vmem:[#allocation7] sm:$0xff] %v94
    %v96 = vld [vmem:[#allocation8] sm:$0xff]
    %v97 = vadd.f32 %v52, %v53
    %v98 = vadd.f32 %v96, %v97
    %99 = vst [vmem:[#allocation8] sm:$0xff] %v98
    %v100 = vld [vmem:[#allocation10] sm:$0xff]
    %v101 = vmul.f32 %v50, %v52
    %v102 = vmul.f32 %v51, %v53
    %v103 = vadd.f32 %v101, %v102
    %v104 = vadd.f32 %v100, %v103
    %105 = vst [vmem:[#allocation10] sm:$0xff] %v104
    %v106 = vld [vmem:[#allocation11] sm:$0xff]
    %v107 = vadd.f32 %v90, %v91
    %v108 = vadd.f32 %v106, %v107
    %109 = vst [vmem:[#allocation11] sm:$0xff] %v108
    // Predicated region
    $region22: #{tpu_custom_call.1} parent=1 // pred_check
      _
    $region23: #{tpu_custom_call.1} parent=1 // pred_check_branch
      %111 = sbr.rel (0) target = $region25
    $region24: #{tpu_custom_call.1} parent=1 // pred_region
      %s113 = ssub.s32 128, 128
      %114 = vsyncadd [#allocation4], %s113
      %s116 = sshll.u32 [#allocation7], 4
      %s117 = int_to_ptr.vmem [resolvable:$true] %s116
      %119 = dma.vmem_to_hbm [thread:$0]  %s117, 128, %s2, [#allocation4]
    $region25: #{tpu_custom_call.1} parent=1 // pred_fallthru
      _
    // Predicated region
    $region26: #{tpu_custom_call.1} parent=1 // pred_check
      _
    $region27: #{tpu_custom_call.1} parent=1 // pred_check_branch
      %121 = sbr.rel (0) target = $region29
    $region28: #{tpu_custom_call.1} parent=1 // pred_region
      %s123 = ssub.s32 128, 128
      %124 = vsyncadd [#allocation9], %s123
      %s126 = sshll.u32 [#allocation8], 4
      %s127 = int_to_ptr.vmem [resolvable:$true] %s126
      %129 = dma.vmem_to_hbm [thread:$0]  %s127, 128, %s3, [#allocation9]
    $region29: #{tpu_custom_call.1} parent=1 // pred_fallthru
      _
    // Predicated region
    $region30: #{tpu_custom_call.1} parent=1 // pred_check
      _
    $region31: #{tpu_custom_call.1} parent=1 // pred_check_branch
      %131 = sbr.rel (0) target = $region33
    $region32: #{tpu_custom_call.1} parent=1 // pred_region
      %s133 = ssub.s32 128, 128
      %134 = vsyncadd [#allocation9], %s133
      %s136 = sshll.u32 [#allocation10], 4
      %s137 = int_to_ptr.vmem [resolvable:$true] %s136
      %139 = dma.vmem_to_hbm [thread:$0]  %s137, 128, %s4, [#allocation9]
    $region33: #{tpu_custom_call.1} parent=1 // pred_fallthru
      _
    // Predicated region
    $region34: #{tpu_custom_call.1} parent=1 // pred_check
      _
    $region35: #{tpu_custom_call.1} parent=1 // pred_check_branch
      %141 = sbr.rel (0) target = $region37
    $region36: #{tpu_custom_call.1} parent=1 // pred_region
      %s143 = ssub.s32 128, 128
      %144 = vsyncadd [#allocation12], %s143
      %s146 = sshll.u32 [#allocation11], 4
      %s147 = int_to_ptr.vmem [resolvable:$true] %s146
      %149 = dma.vmem_to_hbm [thread:$0]  %s147, 128, %s5, [#allocation12]
    $region37: #{tpu_custom_call.1} parent=1 // pred_fallthru
      _
    // Predicated region
    $region38: #{tpu_custom_call.1} parent=1 // pred_check
      _
    $region39: #{tpu_custom_call.1} parent=1 // pred_check_branch
      %151 = sbr.rel (0) target = $region41
    $region40: #{tpu_custom_call.1} parent=1 // pred_region
      %152 = dma.done [#allocation4], 128
    $region41: #{tpu_custom_call.1} parent=1 // pred_fallthru
      _
    // Predicated region
    $region42: #{tpu_custom_call.1} parent=1 // pred_check
      _
    $region43: #{tpu_custom_call.1} parent=1 // pred_check_branch
      %154 = sbr.rel (0) target = $region45
    $region44: #{tpu_custom_call.1} parent=1 // pred_region
      %155 = dma.done [#allocation9], 128
    $region45: #{tpu_custom_call.1} parent=1 // pred_fallthru
      _
    // Predicated region
    $region46: #{tpu_custom_call.1} parent=1 // pred_check
      _
    $region47: #{tpu_custom_call.1} parent=1 // pred_check_branch
      %157 = sbr.rel (0) target = $region49
    $region48: #{tpu_custom_call.1} parent=1 // pred_region
      %158 = dma.done [#allocation9], 128
    $region49: #{tpu_custom_call.1} parent=1 // pred_fallthru
      _
    // Predicated region
    $region50: #{tpu_custom_call.1} parent=1 // pred_check
      _
    $region51: #{tpu_custom_call.1} parent=1 // pred_check_branch
      %160 = sbr.rel (0) target = $region53
    $region52: #{tpu_custom_call.1} parent=1 // pred_region
      %161 = dma.done [#allocation12], 128
    $region53: #{tpu_custom_call.1} parent=1 // pred_fallthru
      _
    %162 = vsyncpa [#allocation3], 1
    %163 = vsyncpa [#allocation6], 1
    %164 = vsyncpa [#allocation4], 1
    %165 = vsyncpa [#allocation9], 1
    %166 = vsyncpa [#allocation12], 1

</llo_original>
